<compile_context>
chip_gen: v5e
topology: v5e:2x2
jax: 0.10.0
libtpu: 0.0.40
codegen_flags: <defaults>
</compile_context>

<pallas_src>
import functools

import jax
import jax.numpy as jnp
from jax.experimental import pallas as pl
from jax.experimental.pallas import tpu as pltpu


_PACK = 16                      # original rows packed per lane-dense packed row
_TM_PACKED_CAP = 4096           # packed rows per tile -> 4096*256*4B = 4 MiB x-block
_VMEM_LIMIT = 32 * 1024 * 1024  # >= scoped default on v6e/v7x, raises v5e's 16 MiB


# --------------------------------------------------------------------------------------
# Pass 1: per-tile partial column sums / sums-of-squares of y = x @ A1 (packed layout).
# Each tile writes its own (8, P*H) block: row 0 = sum, row 1 = sumsq, rows 2..7 = 0.
# "parallel" semantics -> megacore sharding on v7x; host reduces the tiny partials.
# --------------------------------------------------------------------------------------
def _stats_kernel(xp_ref, w_ref, stat_ref, *, tm_p, n_valid, masked):
    y = jnp.dot(xp_ref[...], w_ref[...], preferred_element_type=jnp.float32)
    if masked:  # ragged last tile: zero out rows beyond the real packed-row count
        base = pl.program_id(0) * tm_p
        ridx = jax.lax.broadcasted_iota(jnp.int32, (tm_p, 1), 0) + base
        y = jnp.where(ridx < n_valid, y, 0.0)
    s = jnp.sum(y, axis=0, keepdims=True)          # (1, P*H)   XLU, hidden under MXU
    ssq = jnp.sum(y * y, axis=0, keepdims=True)    # (1, P*H)
    w = s.shape[1]
    rows = jax.lax.broadcasted_iota(jnp.int32, (8, w), 0)
    stat_ref[...] = jnp.where(rows == 0, s, jnp.where(rows == 1, ssq, 0.0))


# --------------------------------------------------------------------------------------
# Pass 2: out_packed = x_packed @ kron(I_P, A_fused) + bias_packed   (BN + both Linears
# folded).  (tm_p, 256) @ (256, 128) -> (tm_p, 128): lane-dense loads and stores.
# --------------------------------------------------------------------------------------
def _out_kernel(xp_ref, w_ref, b_ref, o_ref):
    o_ref[...] = (
        jnp.dot(xp_ref[...], w_ref[...], preferred_element_type=jnp.float32) + b_ref[...]
    )


def transform_cov_forward(x, metrix, K_r, c_out,
                          W1=None, W2=None, gamma=None, beta=None,
                          eps=1e-5, tile_packed_rows=_TM_PACKED_CAP):
    """x: (B, C_in, T, n_node) -> (B, C_in, T, c_out), f32, training-mode BatchNorm."""
    B, C_in, T, n_node = x.shape
    N = B * C_in * T
    P = _PACK

    metrix = metrix.astype(jnp.float32)

    # ---- host-side, loop-invariant parameter folding (tiny) ----
    if W1 is None and W2 is None and gamma is None and beta is None:
        # Default module init: all K_r column groups of y are identical -> stats at width
        # c_out and linear2 collapses to a factor of K_r.
        H_eff = c_out
        A1_eff = metrix                                           # (n_node, c_out)
        A2_eff = K_r * jnp.eye(c_out, dtype=jnp.float32)          # (c_out, c_out)
        gamma_eff = jnp.ones((H_eff,), jnp.float32)
        beta_eff = jnp.zeros((H_eff,), jnp.float32)
    else:
        H_eff = c_out * K_r
        G1 = jnp.concatenate([metrix] * K_r, axis=1)              # (n_node, H)
        G2 = jnp.concatenate([jnp.eye(c_out, dtype=jnp.float32)] * K_r, axis=0)
        A1_eff = G1 if W1 is None else W1.astype(jnp.float32) * G1
        A2_eff = G2 if W2 is None else W2.astype(jnp.float32) * G2
        gamma_eff = (jnp.ones((H_eff,), jnp.float32) if gamma is None
                     else gamma.astype(jnp.float32).reshape(H_eff))
        beta_eff = (jnp.zeros((H_eff,), jnp.float32) if beta is None
                    else beta.astype(jnp.float32).reshape(H_eff))

    x2d = x.reshape(N, n_node).astype(jnp.float32)
    if N % P != 0:
        # TODO(synk): full HBM copy; only hit when B*C_in*T is not a multiple of 16.
        # Zero rows contribute nothing to the sums; padded outputs are sliced off below.
        x2d = jnp.pad(x2d, ((0, P - N % P), (0, 0)))
    n16 = x2d.shape[0] // P
    xp = x2d.reshape(n16, P * n_node)        # free row-major re-view, 256-lane dense

    # Tile selection: single tile if it fits, else fixed large cap + cdiv grid + masking.
    tm_p = n16 if n16 <= tile_packed_rows else tile_packed_rows
    n_tiles = -(-n16 // tm_p)
    masked = (n_tiles * tm_p != n16)

    w_stats = jnp.kron(jnp.eye(P, dtype=jnp.float32), A1_eff)     # (P*n_node, P*H_eff)

    # ---- pass 1: per-tile partial stats of y = x @ A1 ----
    stats = pl.pallas_call(
        functools.partial(_stats_kernel, tm_p=tm_p, n_valid=n16, masked=masked),
        out_shape=jax.ShapeDtypeStruct((n_tiles * 8, P * H_eff), jnp.float32),
        grid_spec=pltpu.PrefetchScalarGridSpec(
            num_scalar_prefetch=0,
            grid=(n_tiles,),
            in_specs=[
                pl.BlockSpec((tm_p, P * n_node), lambda i: (i, 0)),
                pl.BlockSpec((P * n_node, P * H_eff), lambda i: (0, 0)),
            ],
            out_specs=pl.BlockSpec((8, P * H_eff), lambda i: (i, 0)),
        ),
        compiler_params=pltpu.CompilerParams(
            dimension_semantics=("parallel",),
            vmem_limit_bytes=_VMEM_LIMIT),
    )(xp, w_stats)

    # ---- tiny host-side reduction + BN fold ----
    per_tile = stats.reshape(n_tiles, 8, P * H_eff).sum(axis=0)   # (8, P*H_eff)
    col_sum = per_tile[0].reshape(P, H_eff).sum(axis=0)           # (H_eff,)
    col_sumsq = per_tile[1].reshape(P, H_eff).sum(axis=0)         # (H_eff,)
    mean = col_sum / N
    var = jnp.maximum(col_sumsq / N - mean * mean, 0.0)           # biased variance (BN)
    scale = gamma_eff * jax.lax.rsqrt(var + eps)                  # (H_eff,)
    shift = beta_eff - mean * scale                               # (H_eff,)
    A_fused = (A1_eff * scale[None, :]) @ A2_eff                  # (n_node, c_out)
    bias = shift[None, :] @ A2_eff                                # (1, c_out)

    w_out = jnp.kron(jnp.eye(P, dtype=jnp.float32), A_fused)      # (P*n_node, P*c_out)
    bias_p = jnp.tile(bias, (1, P))                               # (1, P*c_out)

    # ---- pass 2: packed, lane-dense out = x @ A_fused + bias ----
    out_p = pl.pallas_call(
        _out_kernel,
        out_shape=jax.ShapeDtypeStruct((n_tiles * tm_p, P * c_out), jnp.float32),
        grid_spec=pltpu.PrefetchScalarGridSpec(
            num_scalar_prefetch=0,
            grid=(n_tiles,),
            in_specs=[
                pl.BlockSpec((tm_p, P * n_node), lambda i: (i, 0)),
                pl.BlockSpec((P * n_node, P * c_out), lambda i: (0, 0)),
                pl.BlockSpec((1, P * c_out), lambda i: (0, 0)),
            ],
            out_specs=pl.BlockSpec((tm_p, P * c_out), lambda i: (i, 0)),
        ),
        compiler_params=pltpu.CompilerParams(
            dimension_semantics=("parallel",),
            vmem_limit_bytes=_VMEM_LIMIT),
    )(xp, w_out, bias_p)

    out2d = out_p[:n16].reshape(n16 * P, c_out)[:N]
    return out2d.reshape(B, C_in, T, c_out)


def transform_cov_reference(x, metrix, K_r, c_out):
    """Pure-JAX reference mirroring the PyTorch forward (training-mode BN)."""
    B, C_in, T, n_node = x.shape
    G1 = jnp.concatenate([metrix] * K_r, axis=1)
    G2 = jnp.concatenate([jnp.eye(c_out, dtype=jnp.float32)] * K_r, axis=0)
    x2d = x.reshape(-1, n_node)
    y = x2d @ G1                                   # W1 == ones
    mean = jnp.mean(y, axis=0, keepdims=True)
    var = jnp.mean((y - mean) ** 2, axis=0, keepdims=True)
    y = (y - mean) / jnp.sqrt(var + 1e-5)
    out = y @ G2                                   # W2 == ones
    return out.reshape(B, C_in, T, c_out)


if __name__ == "__main__":
    # Small shapes consistent with the module: x_shape = [B, c_in, T_slot, n_node]
    B, C_in, T_slot, n_node = 2, 4, 16, 16
    K_r, c_out = 3, 8

    key = jax.random.PRNGKey(0)
    kx, km = jax.random.split(key)
    x = jax.random.normal(kx, (B, C_in, T_slot, n_node), dtype=jnp.float32)
    # gp.Metrix stand-in: deterministic synthetic (n_node, c_out) matrix.
    metrix = jax.random.normal(km, (n_node, c_out), dtype=jnp.float32)

    out = transform_cov_forward(x, metrix, K_r, c_out)
    out = jax.block_until_ready(out)

    ref = transform_cov_reference(x, metrix, K_r, c_out)
    assert out.shape == (B, C_in, T_slot, c_out)
    assert jnp.allclose(out, ref, atol=1e-4, rtol=1e-4)

    print("KERNEL_OK")
</pallas_src>

<mosaic_0001>
module attributes {stable_mosaic.version = 11 : i64} {
  func.func @_stats_kernel(%arg0: i32, %arg1: memref<8x256xf32, #tpu.memory_space<vmem>>, %arg2: memref<256x128xf32, #tpu.memory_space<vmem>>, %arg3: memref<8x128xf32, #tpu.memory_space<vmem>>) attributes {dimension_semantics = [#tpu.dimension_semantics<parallel>], iteration_bounds = array<i64: 1>, scalar_prefetch = 0 : i64, scratch_operands = 0 : i64, tpu.core_type = #tpu.core_type<tc>, window_params = [{transform_indices = @transform_0, window_bounds = array<i64: 8, 256>}, {pipeline_mode = #tpu.pipeline_mode<synchronous>, transform_indices = @transform_1, window_bounds = array<i64: 256, 128>}, {transform_indices = @transform_2, window_bounds = array<i64: 8, 128>}]} {
    %c0 = arith.constant 0 : index
    %c0_0 = arith.constant 0 : index
    %0 = vector.load %arg1[%c0, %c0_0] : memref<8x256xf32, #tpu.memory_space<vmem>>, vector<8x256xf32>
    %c0_1 = arith.constant 0 : index
    %c0_2 = arith.constant 0 : index
    %1 = vector.load %arg2[%c0_1, %c0_2] : memref<256x128xf32, #tpu.memory_space<vmem>>, vector<256x128xf32>
    %cst = arith.constant dense<0.000000e+00> : vector<8x128xf32>
    %2 = tpu.matmul %0, %1, %cst {dimension_numbers = #tpu.dot_dimension_numbers<[1], [0], [0], [1], [0, 0, 1, 1], [], []>} : vector<8x256xf32>, vector<256x128xf32>, vector<8x128xf32> -> vector<8x128xf32>
    %cst_3 = arith.constant dense<0.000000e+00> : vector<128xf32>
    %3 = vector.multi_reduction <add>, %2, %cst_3 [0] : vector<8x128xf32> to vector<128xf32>
    %4 = vector.shape_cast %3 : vector<128xf32> to vector<1x128xf32>
    %5 = arith.mulf %2, %2 : vector<8x128xf32>
    %cst_4 = arith.constant dense<0.000000e+00> : vector<128xf32>
    %6 = vector.multi_reduction <add>, %5, %cst_4 [0] : vector<8x128xf32> to vector<128xf32>
    %7 = vector.shape_cast %6 : vector<128xf32> to vector<1x128xf32>
    %8 = tpu.iota {dimensions = array<i32: 0>} : vector<8x128xi32>
    %c0_i32 = arith.constant 0 : i32
    %9 = vector.broadcast %c0_i32 : i32 to vector<8x128xi32>
    %10 = arith.cmpi eq, %8, %9 : vector<8x128xi32>
    %c1_i32 = arith.constant 1 : i32
    %11 = vector.broadcast %c1_i32 : i32 to vector<8x128xi32>
    %12 = arith.cmpi eq, %8, %11 : vector<8x128xi32>
    %cst_5 = arith.constant 0.000000e+00 : f32
    %13 = vector.shape_cast %7 : vector<1x128xf32> to vector<1x128xf32>
    %14 = vector.broadcast %13 : vector<1x128xf32> to vector<8x128xf32>
    %15 = vector.broadcast %cst_5 : f32 to vector<8x128xf32>
    %16 = arith.select %12, %14, %15 : vector<8x128xi1>, vector<8x128xf32>
    %17 = vector.shape_cast %4 : vector<1x128xf32> to vector<1x128xf32>
    %18 = vector.broadcast %17 : vector<1x128xf32> to vector<8x128xf32>
    %19 = arith.select %10, %18, %16 : vector<8x128xi1>, vector<8x128xf32>
    %c0_6 = arith.constant 0 : index
    %c0_7 = arith.constant 0 : index
    %20 = vector.load %arg3[%c0_6, %c0_7] : memref<8x128xf32, #tpu.memory_space<vmem>>, vector<8x128xf32>
    tpu.vector_store %arg3[%c0_6, %c0_7], %19 {strides = array<i32>} : memref<8x128xf32, #tpu.memory_space<vmem>>, vector<8x128xf32>,
    return
  }
  func.func @transform_0(%arg0: i32) -> (i32, i32) {
    %c0_i32 = arith.constant 0 : i32
    %c0_i32_0 = arith.constant 0 : i32
    return %arg0, %c0_i32 : i32, i32
  }
  func.func @transform_1(%arg0: i32) -> (i32, i32) {
    %c0_i32 = arith.constant 0 : i32
    %c0_i32_0 = arith.constant 0 : i32
    %c0_i32_1 = arith.constant 0 : i32
    return %c0_i32, %c0_i32_0 : i32, i32
  }
  func.func @transform_2(%arg0: i32) -> (i32, i32) {
    %c0_i32 = arith.constant 0 : i32
    %c0_i32_0 = arith.constant 0 : i32
    return %arg0, %c0_i32 : i32, i32
  }
}

</mosaic_0001>

<llo_original>
// kernel: tpu_custom_call.1
$region0: #{tpu_custom_call.1}
  #allocation0 [shape = 'u32[]', space=smem, size = 0x4, offset = 0x4, fixed_abs, tag = 'smem constant byte address 0x4 - core index']
  #allocation1 [shape = 'u32[72,128]{1,0:T(1,128)}', space=vmem, size = 0x9000, scoped, tag = 'internal scratch']
  %s0 = inlined_call_operand.hbm [shape: f32[8,256], index: 0, kind: input, shape index: {}]
  %s1 = inlined_call_operand.hbm [shape: f32[256,128], index: 1, kind: input, shape index: {}]
  %s2 = inlined_call_operand.hbm [shape: f32[8,128], index: 2, kind: output, shape index: {}]
  %s3 = sld [smem:[#allocation0]]
  $region26: #{tpu_custom_call.1} parent=0
    _
  %s5 = ssub.s32 1, %s3
  %s6 = scalar_select 0, %s5, %s3
  $region1: #{tpu_custom_call.1} parent=0
    #allocation2 [shape = 'u8[8192]{0}', space=vmem, size = 0x2000, scoped, tag = 'input window, operand 0, single buffered']
    #allocation3 [shape = 's32[1]{0}', space=sflag, size = 0x4, scoped, tag = 'scoped memory for tpu_custom_call.1']
    #allocation4 [shape = 's32[1]{0}', space=sflag, size = 0x4, scoped, tag = 'scoped memory for tpu_custom_call.1']
    #allocation5 [shape = 'u8[131072]{0}', space=vmem, size = 0x20000, scoped, tag = 'input window, operand 1, single buffered']
    #allocation6 [shape = 's32[1]{0}', space=sflag, size = 0x4, scoped, tag = 'scoped memory for tpu_custom_call.1']
    #allocation7 [shape = 'u8[4096]{0}', space=vmem, size = 0x1000, scoped, tag = 'output window, operand 0, single buffered']
    %7 = vsyncpa [#allocation3], 0
    %8 = vsyncpa [#allocation6], 0
    %9 = vsyncpa [#allocation4], 0
    // Predicated region
    $region2: #{tpu_custom_call.1} parent=1 // pred_check
      _
    $region3: #{tpu_custom_call.1} parent=1 // pred_check_branch
      %11 = sbr.rel (0) target = $region5
    $region4: #{tpu_custom_call.1} parent=1 // pred_region
      %13 = vsyncadd [#allocation3], 0
      %s15 = sshll.u32 %s0, 4
      %s16 = int_to_ptr.hbm [resolvable:$true] %s15
      %s17 = sshll.u32 [#allocation2], 4
      %s18 = int_to_ptr.vmem [resolvable:$true] %s17
      %20 = dma.hbm_to_vmem [thread:$0]  %s16, 256, %s18, [#allocation3]
    $region5: #{tpu_custom_call.1} parent=1 // pred_fallthru
      _
    // Predicated region
    $region6: #{tpu_custom_call.1} parent=1 // pred_check
      _
    $region7: #{tpu_custom_call.1} parent=1 // pred_check_branch
      %22 = sbr.rel (0) target = $region9
    $region8: #{tpu_custom_call.1} parent=1 // pred_region
      %24 = vsyncadd [#allocation6], 0
      %s25 = sshll.u32 %s1, 4
      %s26 = int_to_ptr.hbm [resolvable:$true] %s25
      %s27 = sshll.u32 [#allocation5], 4
      %s28 = int_to_ptr.vmem [resolvable:$true] %s27
      %33 = dma.hbm_to_vmem [thread:$0]  %s26, 4096, %s28, [#allocation6], 128, 128, 8
    $region9: #{tpu_custom_call.1} parent=1 // pred_fallthru
      _
    // Predicated region
    $region10: #{tpu_custom_call.1} parent=1 // pred_check
      _
    $region11: #{tpu_custom_call.1} parent=1 // pred_check_branch
      %35 = sbr.rel (0) target = $region13
    $region12: #{tpu_custom_call.1} parent=1 // pred_region
      %37 = dma.done [#allocation3], 256
    $region13: #{tpu_custom_call.1} parent=1 // pred_fallthru
      _
    // Predicated region
    $region14: #{tpu_custom_call.1} parent=1 // pred_check
      _
    $region15: #{tpu_custom_call.1} parent=1 // pred_check_branch
      %39 = sbr.rel (0) target = $region17
    $region16: #{tpu_custom_call.1} parent=1 // pred_region
      %41 = dma.done [#allocation6], 4096
    $region17: #{tpu_custom_call.1} parent=1 // pred_fallthru
      _
    %v42 = vld [vmem:[#allocation2] sm:$0xff]
    %v43 = vld [vmem:[#allocation2 + $0x8] sm:$0xff]
    %v44 = vld [vmem:[#allocation5] sm:$0xff]
    %v45 = vld [vmem:[#allocation5 + $0x8] sm:$0xff]
    %v46 = vld [vmem:[#allocation5 + $0x10] sm:$0xff]
    %v47 = vld [vmem:[#allocation5 + $0x18] sm:$0xff]
    %v48 = vld [vmem:[#allocation5 + $0x20] sm:$0xff]
    %v49 = vld [vmem:[#allocation5 + $0x28] sm:$0xff]
    %v50 = vld [vmem:[#allocation5 + $0x30] sm:$0xff]
    %v51 = vld [vmem:[#allocation5 + $0x38] sm:$0xff]
    %v52 = vld [vmem:[#allocation5 + $0x40] sm:$0xff]
    %v53 = vld [vmem:[#allocation5 + $0x48] sm:$0xff]
    %v54 = vld [vmem:[#allocation5 + $0x50] sm:$0xff]
    %v55 = vld [vmem:[#allocation5 + $0x58] sm:$0xff]
    %v56 = vld [vmem:[#allocation5 + $0x60] sm:$0xff]
    %v57 = vld [vmem:[#allocation5 + $0x68] sm:$0xff]
    %v58 = vld [vmem:[#allocation5 + $0x70] sm:$0xff]
    %v59 = vld [vmem:[#allocation5 + $0x78] sm:$0xff]
    %v60 = vld [vmem:[#allocation5 + $0x80] sm:$0xff]
    %v61 = vld [vmem:[#allocation5 + $0x88] sm:$0xff]
    %v62 = vld [vmem:[#allocation5 + $0x90] sm:$0xff]
    %v63 = vld [vmem:[#allocation5 + $0x98] sm:$0xff]
    %v64 = vld [vmem:[#allocation5 + $0xa0] sm:$0xff]
    %v65 = vld [vmem:[#allocation5 + $0xa8] sm:$0xff]
    %v66 = vld [vmem:[#allocation5 + $0xb0] sm:$0xff]
    %v67 = vld [vmem:[#allocation5 + $0xb8] sm:$0xff]
    %v68 = vld [vmem:[#allocation5 + $0xc0] sm:$0xff]
    %v69 = vld [vmem:[#allocation5 + $0xc8] sm:$0xff]
    %v70 = vld [vmem:[#allocation5 + $0xd0] sm:$0xff]
    %v71 = vld [vmem:[#allocation5 + $0xd8] sm:$0xff]
    %v72 = vld [vmem:[#allocation5 + $0xe0] sm:$0xff]
    %v73 = vld [vmem:[#allocation5 + $0xe8] sm:$0xff]
    %v74 = vld [vmem:[#allocation5 + $0xf0] sm:$0xff]
    %v75 = vld [vmem:[#allocation5 + $0xf8] sm:$0xff]
    %76 = vmatpush.msra.mxu0 %v59
    %77 = vmatpush.msra.mxu0 %v58
    %78 = vmatpush.msra.mxu0 %v57
    %79 = vmatpush.msra.mxu0 %v56
    %80 = vmatpush.msra.mxu0 %v55
    %81 = vmatpush.msra.mxu0 %v54
    %82 = vmatpush.msra.mxu0 %v53
    %83 = vmatpush.msra.mxu0 %v52
    %84 = vmatpush.msra.mxu0 %v51
    %85 = vmatpush.msra.mxu0 %v50
    %86 = vmatpush.msra.mxu0 %v49
    %87 = vmatpush.msra.mxu0 %v48
    %88 = vmatpush.msra.mxu0 %v47
    %89 = vmatpush.msra.mxu0 %v46
    %90 = vmatpush.msra.mxu0 %v45
    %91 = vmatpush.msra.mxu0 %v44
    %92 = vmatmul.f32.gmra.mxu0 %v42
    %v93 = vpop.f32.mrf.mxu0
    %v94 = vadd.f32 0.0, %v93
    %95 = vdwg.mxu0
    %96 = vmatpush.msra.mxu0 %v75
    %97 = vmatpush.msra.mxu0 %v74
    %98 = vmatpush.msra.mxu0 %v73
    %99 = vmatpush.msra.mxu0 %v72
    %100 = vmatpush.msra.mxu0 %v71
    %101 = vmatpush.msra.mxu0 %v70
    %102 = vmatpush.msra.mxu0 %v69
    %103 = vmatpush.msra.mxu0 %v68
    %104 = vmatpush.msra.mxu0 %v67
    %105 = vmatpush.msra.mxu0 %v66
    %106 = vmatpush.msra.mxu0 %v65
    %107 = vmatpush.msra.mxu0 %v64
    %108 = vmatpush.msra.mxu0 %v63
    %109 = vmatpush.msra.mxu0 %v62
    %110 = vmatpush.msra.mxu0 %v61
    %111 = vmatpush.msra.mxu0 %v60
    %112 = vmatmul.f32.gmra.mxu0 %v43
    %v113 = vpop.f32.mrf.mxu0
    %v114 = vadd.f32 %v94, %v113
    %115 = vdwg.mxu0
    %v116 = vrot.slane %v114, 4
    %v117 = vadd.f32 %v114, %v116
    %v118 = vrot.slane %v117, 2
    %v119 = vadd.f32 %v117, %v118
    %v120 = vrot.slane %v119, 1
    %v121 = vadd.f32 %v119, %v120
    %v122 = vmul.f32 %v114, %v114
    %v123 = vrot.slane %v122, 4
    %v124 = vadd.f32 %v122, %v123
    %v125 = vrot.slane %v124, 2
    %v126 = vadd.f32 %v124, %v125
    %v127 = vrot.slane %v126, 1
    %v128 = vadd.f32 %v126, %v127
    %v129 = vlaneseq
    %v130 = vshrl.u32 %v129, 7
    %vm131 = vcmp.eq.s32.totalorder %v130, 0
    %vm132 = vcmp.eq.s32.totalorder %v130, 1
    %v133 = vsel %vm132, %v128, 0.0
    %v134 = vsel %vm131, %v121, %v133
    %135 = vst [vmem:[#allocation7] sm:$0xff] %v134
    // Predicated region
    $region18: #{tpu_custom_call.1} parent=1 // pred_check
      _
    $region19: #{tpu_custom_call.1} parent=1 // pred_check_branch
      %137 = sbr.rel (0) target = $region21
    $region20: #{tpu_custom_call.1} parent=1 // pred_region
      %139 = vsyncadd [#allocation4], 0
      %s141 = sshll.u32 [#allocation7], 4
      %s142 = int_to_ptr.vmem [resolvable:$true] %s141
      %s143 = sshll.u32 %s2, 4
      %s144 = int_to_ptr.hbm [resolvable:$true] %s143
      %146 = dma.vmem_to_hbm [thread:$0]  %s142, 128, %s144, [#allocation4]
    $region21: #{tpu_custom_call.1} parent=1 // pred_fallthru
      _
    // Predicated region
    $region22: #{tpu_custom_call.1} parent=1 // pred_check
      _
    $region23: #{tpu_custom_call.1} parent=1 // pred_check_branch
      %148 = sbr.rel (0) target = $region25
    $region24: #{tpu_custom_call.1} parent=1 // pred_region
      %150 = dma.done [#allocation4], 128
    $region25: #{tpu_custom_call.1} parent=1 // pred_fallthru
      _
    %151 = vsyncpa [#allocation3], 1
    %152 = vsyncpa [#allocation6], 1
    %153 = vsyncpa [#allocation4], 1

</llo_original>
